<compile_context>
chip_gen: v6e
topology: v6e:2x2x1
jax: 0.10.0
libtpu: 0.0.40
codegen_flags: <defaults>
</compile_context>

<pallas_src>
import jax
import jax.numpy as jnp
from jax.experimental import pallas as pl
from jax.experimental.pallas import tpu as pltpu

EPS = 1e-5


def adain_kernel(x_ref, style_ref, ws_ref, bs_ref, wt_ref, bt_ref, o_ref):
    # x_ref:     (gb, nroi, F)   node features for gb graphs
    # style_ref: (gb, 1, S)      style vectors for those graphs
    # ws_ref:    (S, F)          scale Linear weight (stored as W^T)
    # bs_ref:    (1, F)          scale Linear bias
    # wt_ref:    (S, F)          shift Linear weight (stored as W^T)
    # bt_ref:    (1, F)          shift Linear bias
    # o_ref:     (gb, nroi, F)
    s = style_ref[:, 0, :].astype(jnp.float32)                         # (gb, S)

    # Two tiny MXU dots (latency-only); avoids slicing a packed result at lane 32.
    scale = (jnp.dot(s, ws_ref[...].astype(jnp.float32),
                     preferred_element_type=jnp.float32)
             + bs_ref[...].astype(jnp.float32))[:, None, :]            # (gb, 1, F)
    shift = (jnp.dot(s, wt_ref[...].astype(jnp.float32),
                     preferred_element_type=jnp.float32)
             + bt_ref[...].astype(jnp.float32))[:, None, :]            # (gb, 1, F)

    # Per-graph instance-norm stats over the node axis (axis=1), f32, two-pass var.
    xf = x_ref[...].astype(jnp.float32)                                # (gb, nroi, F)
    mean = jnp.mean(xf, axis=1, keepdims=True)                         # (gb, 1, F)
    diff = xf - mean
    var = jnp.mean(diff * diff, axis=1, keepdims=True)                 # biased variance

    # Folded affine: out = a*x + c (broadcast over nroi == repeat_interleave in ref).
    a = scale * jax.lax.rsqrt(var + EPS)                               # (gb, 1, F)
    c = shift - a * mean                                               # (gb, 1, F)
    o_ref[...] = (a * xf + c).astype(o_ref.dtype)                      # fused cast + store


def _vmem_limit_bytes():
    """Generation-aware scoped-VMEM limit (leave headroom on 64 MiB v7x parts)."""
    try:
        cap = pltpu.get_tpu_info().vmem_capacity_bytes
    except Exception:
        cap = 128 << 20
    if cap <= (64 << 20):          # v7x-class: 64 MiB physical VMEM per TC
        return 36 << 20
    return 64 << 20                # v5e / v6e: 128 MiB physical VMEM


def _choose_graphs_per_block(B, nroi, F, vmem_limit_bytes):
    """Largest divisor of B that (a) fits the padded-VMEM budget and (b) keeps a
    multi-step grid (>= min(B, 8) steps) so pipelining / megacore sharding work."""
    padded_rows = ((nroi + 7) // 8) * 8          # sublane padding
    padded_lanes = ((F + 127) // 128) * 128      # lane padding (F=32 -> 128, i.e. 4x)
    per_graph_padded = padded_rows * padded_lanes * 4   # f32 bytes in VMEM
    # double-buffered input + double-buffered output + ~2 block-sized f32 temporaries
    resident_per_graph = per_graph_padded * 6
    budget = int(vmem_limit_bytes * 0.75)
    max_gb_vmem = max(1, budget // resident_per_graph)

    min_steps = min(B, 8)                        # keep the pipeline (and both v7x TCs) busy
    max_gb_steps = max(1, B // min_steps)

    cap = min(max_gb_vmem, max_gb_steps)
    gb = 1
    for d in range(1, B + 1):
        if B % d == 0 and d <= cap:
            gb = d
    return gb


def adain_forward(x, style_vector, nroi, w_scale, b_scale, w_shift, b_shift):
    """x: [N, F] with N = B*nroi (contiguous, equal-size graphs); style_vector: [B, S]."""
    N, F = x.shape
    B, S = style_vector.shape
    assert N == B * nroi

    vmem_limit = _vmem_limit_bytes()
    gb = _choose_graphs_per_block(B, nroi, F, vmem_limit)

    x3 = x.reshape(B, nroi, F)                         # free row-major view
    style3 = style_vector.reshape(B, 1, S)             # trailing dims stay full-extent
    b_scale2 = b_scale.reshape(1, F)
    b_shift2 = b_shift.reshape(1, F)

    itemsize = jnp.dtype(x.dtype).itemsize
    cost = pl.CostEstimate(
        flops=int(8 * N * F + 4 * B * S * F),
        transcendentals=int(B * F),
        bytes_accessed=int(2 * N * F * itemsize + B * S * itemsize
                           + 2 * (S * F + F) * 4),
    )

    out3 = pl.pallas_call(
        adain_kernel,
        out_shape=jax.ShapeDtypeStruct((B, nroi, F), x.dtype),
        grid_spec=pltpu.PrefetchScalarGridSpec(
            num_scalar_prefetch=0,
            grid=(B // gb,),
            in_specs=[
                pl.BlockSpec((gb, nroi, F), lambda b: (b, 0, 0)),   # x (gb graphs)
                pl.BlockSpec((gb, 1, S), lambda b: (b, 0, 0)),      # style
                pl.BlockSpec((S, F), lambda b: (0, 0)),             # w_scale (W^T)
                pl.BlockSpec((1, F), lambda b: (0, 0)),             # b_scale
                pl.BlockSpec((S, F), lambda b: (0, 0)),             # w_shift (W^T)
                pl.BlockSpec((1, F), lambda b: (0, 0)),             # b_shift
            ],
            out_specs=pl.BlockSpec((gb, nroi, F), lambda b: (b, 0, 0)),
        ),
        compiler_params=pltpu.CompilerParams(
            dimension_semantics=("parallel",),      # independent blocks -> v7x megacore
            vmem_limit_bytes=vmem_limit,
        ),
        cost_estimate=cost,
    )(x3, style3, w_scale, b_scale2, w_shift, b_shift2)

    return out3.reshape(N, F)


def adain_reference(x, style_vector, nroi, w_scale, b_scale, w_shift, b_shift):
    """Pure-JAX reference mirroring the PyTorch forward."""
    N, F = x.shape
    B = style_vector.shape[0]
    scale = style_vector @ w_scale + b_scale                     # [B, F]
    shift = style_vector @ w_shift + b_shift                     # [B, F]
    x3 = x.reshape(B, nroi, F).astype(jnp.float32)
    mean = jnp.mean(x3, axis=1, keepdims=True)
    var = jnp.mean((x3 - mean) ** 2, axis=1, keepdims=True)      # biased
    xn = (x3 - mean) / jnp.sqrt(var + EPS)
    out = scale[:, None, :] * xn + shift[:, None, :]
    return out.reshape(N, F).astype(x.dtype)


if __name__ == "__main__":
    # Small shapes consistent with the module:
    B = 2            # graphs in the batch
    nroi = 16        # nodes (ROIs) per graph
    num_features = 32
    style_dim = 16

    key = jax.random.PRNGKey(0)
    k_x, k_s, k_ws, k_bs, k_wt, k_bt = jax.random.split(key, 6)

    x = jax.random.normal(k_x, (B * nroi, num_features), dtype=jnp.float32)
    style = jax.random.normal(k_s, (B, style_dim), dtype=jnp.float32)

    # Deterministic synthetic Linear params (weights stored as [S, F], i.e. W^T).
    lim = 1.0 / (style_dim ** 0.5)
    w_scale = jax.random.uniform(k_ws, (style_dim, num_features), jnp.float32, -lim, lim)
    b_scale = jax.random.uniform(k_bs, (num_features,), jnp.float32, -lim, lim)
    w_shift = jax.random.uniform(k_wt, (style_dim, num_features), jnp.float32, -lim, lim)
    b_shift = jax.random.uniform(k_bt, (num_features,), jnp.float32, -lim, lim)

    out = adain_forward(x, style, nroi, w_scale, b_scale, w_shift, b_shift)
    out = jax.block_until_ready(out)

    ref = adain_reference(x, style, nroi, w_scale, b_scale, w_shift, b_shift)
    assert out.shape == (B * nroi, num_features)
    assert jnp.allclose(out, ref, atol=1e-4, rtol=1e-4)

    print("KERNEL_OK")
</pallas_src>

<mosaic_0001>
module attributes {stable_mosaic.version = 11 : i64} {
  func.func @adain_kernel(%arg0: i32, %arg1: memref<1x16x32xf32, #tpu.memory_space<vmem>>, %arg2: memref<1x1x16xf32, #tpu.memory_space<vmem>>, %arg3: memref<16x32xf32, #tpu.memory_space<vmem>>, %arg4: memref<1x32xf32, #tpu.memory_space<vmem>>, %arg5: memref<16x32xf32, #tpu.memory_space<vmem>>, %arg6: memref<1x32xf32, #tpu.memory_space<vmem>>, %arg7: memref<1x16x32xf32, #tpu.memory_space<vmem>>) attributes {dimension_semantics = [#tpu.dimension_semantics<parallel>], iteration_bounds = array<i64: 2>, scalar_prefetch = 0 : i64, scratch_operands = 0 : i64, tpu.core_type = #tpu.core_type<tc>, window_params = [{transform_indices = @transform_0, window_bounds = array<i64: 1, 16, 32>}, {transform_indices = @transform_1, window_bounds = array<i64: 1, 1, 16>}, {pipeline_mode = #tpu.pipeline_mode<synchronous>, transform_indices = @transform_2, window_bounds = array<i64: 16, 32>}, {pipeline_mode = #tpu.pipeline_mode<synchronous>, transform_indices = @transform_3, window_bounds = array<i64: 1, 32>}, {pipeline_mode = #tpu.pipeline_mode<synchronous>, transform_indices = @transform_4, window_bounds = array<i64: 16, 32>}, {pipeline_mode = #tpu.pipeline_mode<synchronous>, transform_indices = @transform_5, window_bounds = array<i64: 1, 32>}, {transform_indices = @transform_6, window_bounds = array<i64: 1, 16, 32>}]} {
    %c0 = arith.constant 0 : index
    %c0_0 = arith.constant 0 : index
    %c0_1 = arith.constant 0 : index
    %0 = vector.load %arg2[%c0, %c0_0, %c0_1] : memref<1x1x16xf32, #tpu.memory_space<vmem>>, vector<1x1x16xf32>
    %1 = vector.shape_cast %0 : vector<1x1x16xf32> to vector<1x16xf32>
    %c0_2 = arith.constant 0 : index
    %c0_3 = arith.constant 0 : index
    %2 = vector.load %arg3[%c0_2, %c0_3] : memref<16x32xf32, #tpu.memory_space<vmem>>, vector<16x32xf32>
    %cst = arith.constant dense<0.000000e+00> : vector<1x32xf32>
    %3 = tpu.matmul %1, %2, %cst {dimension_numbers = #tpu.dot_dimension_numbers<[1], [0], [0], [1], [0, 0, 1, 1], [], []>} : vector<1x16xf32>, vector<16x32xf32>, vector<1x32xf32> -> vector<1x32xf32>
    %c0_4 = arith.constant 0 : index
    %c0_5 = arith.constant 0 : index
    %4 = vector.load %arg4[%c0_4, %c0_5] : memref<1x32xf32, #tpu.memory_space<vmem>>, vector<1x32xf32>
    %5 = arith.addf %3, %4 : vector<1x32xf32>
    %6 = vector.shape_cast %5 : vector<1x32xf32> to vector<1x1x32xf32>
    %c0_6 = arith.constant 0 : index
    %c0_7 = arith.constant 0 : index
    %7 = vector.load %arg5[%c0_6, %c0_7] : memref<16x32xf32, #tpu.memory_space<vmem>>, vector<16x32xf32>
    %cst_8 = arith.constant dense<0.000000e+00> : vector<1x32xf32>
    %8 = tpu.matmul %1, %7, %cst_8 {dimension_numbers = #tpu.dot_dimension_numbers<[1], [0], [0], [1], [0, 0, 1, 1], [], []>} : vector<1x16xf32>, vector<16x32xf32>, vector<1x32xf32> -> vector<1x32xf32>
    %c0_9 = arith.constant 0 : index
    %c0_10 = arith.constant 0 : index
    %9 = vector.load %arg6[%c0_9, %c0_10] : memref<1x32xf32, #tpu.memory_space<vmem>>, vector<1x32xf32>
    %10 = arith.addf %8, %9 : vector<1x32xf32>
    %11 = vector.shape_cast %10 : vector<1x32xf32> to vector<1x1x32xf32>
    %c0_11 = arith.constant 0 : index
    %c0_12 = arith.constant 0 : index
    %c0_13 = arith.constant 0 : index
    %12 = vector.load %arg1[%c0_11, %c0_12, %c0_13] : memref<1x16x32xf32, #tpu.memory_space<vmem>>, vector<1x16x32xf32>
    %cst_14 = arith.constant dense<0.000000e+00> : vector<1x32xf32>
    %13 = vector.multi_reduction <add>, %12, %cst_14 [1] : vector<1x16x32xf32> to vector<1x32xf32>
    %14 = vector.shape_cast %13 : vector<1x32xf32> to vector<1x1x32xf32>
    %cst_15 = arith.constant 1.600000e+01 : f32
    %15 = vector.broadcast %cst_15 : f32 to vector<1x1x32xf32>
    %16 = arith.divf %14, %15 : vector<1x1x32xf32>
    %17 = vector.broadcast %16 : vector<1x1x32xf32> to vector<1x16x32xf32>
    %18 = arith.subf %12, %17 : vector<1x16x32xf32>
    %19 = arith.mulf %18, %18 : vector<1x16x32xf32>
    %cst_16 = arith.constant dense<0.000000e+00> : vector<1x32xf32>
    %20 = vector.multi_reduction <add>, %19, %cst_16 [1] : vector<1x16x32xf32> to vector<1x32xf32>
    %21 = vector.shape_cast %20 : vector<1x32xf32> to vector<1x1x32xf32>
    %cst_17 = arith.constant 1.600000e+01 : f32
    %22 = vector.broadcast %cst_17 : f32 to vector<1x1x32xf32>
    %23 = arith.divf %21, %22 : vector<1x1x32xf32>
    %cst_18 = arith.constant 9.99999974E-6 : f32
    %24 = vector.broadcast %cst_18 : f32 to vector<1x1x32xf32>
    %25 = arith.addf %23, %24 : vector<1x1x32xf32>
    %26 = math.rsqrt %25 : vector<1x1x32xf32>
    %27 = arith.mulf %6, %26 : vector<1x1x32xf32>
    %28 = arith.mulf %27, %16 : vector<1x1x32xf32>
    %29 = arith.subf %11, %28 : vector<1x1x32xf32>
    %30 = vector.broadcast %27 : vector<1x1x32xf32> to vector<1x16x32xf32>
    %31 = arith.mulf %30, %12 : vector<1x16x32xf32>
    %32 = vector.broadcast %29 : vector<1x1x32xf32> to vector<1x16x32xf32>
    %33 = arith.addf %31, %32 : vector<1x16x32xf32>
    %c0_19 = arith.constant 0 : index
    %c0_20 = arith.constant 0 : index
    %c0_21 = arith.constant 0 : index
    %34 = vector.load %arg7[%c0_19, %c0_20, %c0_21] : memref<1x16x32xf32, #tpu.memory_space<vmem>>, vector<1x16x32xf32>
    tpu.vector_store %arg7[%c0_19, %c0_20, %c0_21], %33 {strides = array<i32>} : memref<1x16x32xf32, #tpu.memory_space<vmem>>, vector<1x16x32xf32>,
    return
  }
  func.func @transform_0(%arg0: i32) -> (i32, i32, i32) {
    %c0_i32 = arith.constant 0 : i32
    %c0_i32_0 = arith.constant 0 : i32
    %c0_i32_1 = arith.constant 0 : i32
    return %arg0, %c0_i32, %c0_i32_0 : i32, i32, i32
  }
  func.func @transform_1(%arg0: i32) -> (i32, i32, i32) {
    %c0_i32 = arith.constant 0 : i32
    %c0_i32_0 = arith.constant 0 : i32
    %c0_i32_1 = arith.constant 0 : i32
    return %arg0, %c0_i32, %c0_i32_0 : i32, i32, i32
  }
  func.func @transform_2(%arg0: i32) -> (i32, i32) {
    %c0_i32 = arith.constant 0 : i32
    %c0_i32_0 = arith.constant 0 : i32
    %c0_i32_1 = arith.constant 0 : i32
    return %c0_i32, %c0_i32_0 : i32, i32
  }
  func.func @transform_3(%arg0: i32) -> (i32, i32) {
    %c0_i32 = arith.constant 0 : i32
    %c0_i32_0 = arith.constant 0 : i32
    %c0_i32_1 = arith.constant 0 : i32
    return %c0_i32, %c0_i32_0 : i32, i32
  }
  func.func @transform_4(%arg0: i32) -> (i32, i32) {
    %c0_i32 = arith.constant 0 : i32
    %c0_i32_0 = arith.constant 0 : i32
    %c0_i32_1 = arith.constant 0 : i32
    return %c0_i32, %c0_i32_0 : i32, i32
  }
  func.func @transform_5(%arg0: i32) -> (i32, i32) {
    %c0_i32 = arith.constant 0 : i32
    %c0_i32_0 = arith.constant 0 : i32
    %c0_i32_1 = arith.constant 0 : i32
    return %c0_i32, %c0_i32_0 : i32, i32
  }
  func.func @transform_6(%arg0: i32) -> (i32, i32, i32) {
    %c0_i32 = arith.constant 0 : i32
    %c0_i32_0 = arith.constant 0 : i32
    %c0_i32_1 = arith.constant 0 : i32
    return %arg0, %c0_i32, %c0_i32_0 : i32, i32, i32
  }
}

</mosaic_0001>

<llo_original>
// kernel: tpu_custom_call.1
$region0: #{tpu_custom_call.1}
  #allocation0 [shape = 'u32[]', space=smem, size = 0x4, offset = 0x4, fixed_abs, tag = 'smem constant byte address 0x4 - core index']
  #allocation1 [shape = 'u32[144,128]{1,0:T(1,128)}', space=vmem, size = 0x12000, scoped, tag = 'internal scratch']
  %s0 = inlined_call_operand.hbm [shape: f32[2,16,32], index: 0, kind: input, shape index: {}]
  %s1 = inlined_call_operand.hbm [shape: f32[2,1,16], index: 1, kind: input, shape index: {}]
  %s2 = inlined_call_operand.hbm [shape: f32[16,32], index: 2, kind: input, shape index: {}]
  %s3 = inlined_call_operand.vmem [shape: f32[1,32], index: 3, kind: input, shape index: {}]
  %s4 = inlined_call_operand.hbm [shape: f32[16,32], index: 4, kind: input, shape index: {}]
  %s5 = inlined_call_operand.vmem [shape: f32[1,32], index: 5, kind: input, shape index: {}]
  %s6 = inlined_call_operand.hbm [shape: f32[2,16,32], index: 6, kind: output, shape index: {}]
  %s7 = sld [smem:[#allocation0]]
  $region73: #{tpu_custom_call.1} parent=0
    _
  %s9 = ssub.s32 1, %s7
  %s10 = scalar_select 0, %s9, %s7
  $region1: #{tpu_custom_call.1} parent=0
    #allocation2 [shape = 'u8[16384]{0}', space=vmem, size = 0x4000, scoped, tag = 'input window, operand 0']
    #allocation3 [shape = 's32[2]{0}', space=sflag, size = 0x8, scoped, tag = 'scoped memory for tpu_custom_call.1']
    #allocation4 [shape = 's32[2]{0}', space=sflag, size = 0x8, scoped, tag = 'scoped memory for tpu_custom_call.1']
    #allocation5 [shape = 'u8[1024]{0}', space=vmem, size = 0x400, scoped, tag = 'input window, operand 1']
    #allocation6 [shape = 's32[2]{0}', space=sflag, size = 0x8, scoped, tag = 'scoped memory for tpu_custom_call.1']
    #allocation7 [shape = 'u8[8192]{0}', space=vmem, size = 0x2000, scoped, tag = 'input window, operand 2, single buffered']
    #allocation8 [shape = 'u8[8192]{0}', space=vmem, size = 0x2000, scoped, tag = 'input window, operand 4, single buffered']
    #allocation9 [shape = 's32[1]{0}', space=sflag, size = 0x4, scoped, tag = 'scoped memory for tpu_custom_call.1']
    #allocation10 [shape = 'u8[16384]{0}', space=vmem, size = 0x4000, scoped, tag = 'output window, operand 0']
    %11 = vsyncpa [#allocation3], 0
    %s12 = scalar_lea.sflag [#allocation3], 1
    %13 = vsyncpa %s12, 0
    %14 = vsyncpa [#allocation6], 0
    %s15 = scalar_lea.sflag [#allocation6], 1
    %16 = vsyncpa %s15, 0
    %17 = vsyncpa [#allocation9], 0
    %18 = vsyncpa [#allocation4], 0
    %s19 = scalar_lea.sflag [#allocation4], 1
    %20 = vsyncpa %s19, 0
    loop: start=0, step=1, limit=4
    $region2: #{tpu_custom_call.1} parent=1 // loop_pre_header
      _
    $region3: #{tpu_custom_call.1} parent=1 // loop_header
      %s22 = sphi 0, %s26
      %p23 = scmp.ge.s32.totalorder %s22, 4
      %s32 = sphi 0, %s34
      %s35 = sphi 0, %s32
      %s36 = sphi 0, %s35
      %s52 = sphi 0, %s36
      %s58 = sphi 0, %s60
      %s61 = sphi 0, %s58
      %s62 = sphi 0, %s61
      %s78 = sphi 0, %s62
      %s82 = sphi 0, %s82
      %s84 = sphi 0, %s82
      %s85 = sphi 0, %s84
      %s99 = sphi 0, %s85
      %s103 = sphi 0, %s103
      %s105 = sphi 0, %s103
      %s106 = sphi 0, %s105
      %s120 = sphi 0, %s106
      %s124 = sphi 0, %s124
      %s126 = sphi 0, %s124
      %s127 = sphi 0, %s126
      %s141 = sphi 0, %s127
      %s145 = sphi 0, %s145
      %s147 = sphi 0, %s145
      %s148 = sphi 0, %s147
      %s162 = sphi 0, %s148
      %s168 = sphi 0, %s170
      %s171 = sphi 0, %s168
      %s172 = sphi 0, %s171
      %s188 = sphi 0, %s172
    $region4: #{tpu_custom_call.1} parent=1 // loop_header_branch
      %25 = sbr.rel (%p23) target = $region8
    $region5: #{tpu_custom_call.1} parent=1 // loop_body
      %s27 = ssub.s32 %s22, 1
      %s28 = ssub.s32 %s22, 2
      %s29 = sadd.s32 %s22, 1
      %s30 = ssub.s32 %s22, %s29
      %p31 = scmp.eq.s32.totalorder %s30, 0
      %s33 = sadd.s32 %s32, 1
      %s34 = scalar_select %p31, %s32, %s33
      %p37 = pneg %p31
      %p38 = scmp.eq.s32.totalorder %s22, 1
      %p39 = por %p37, %p38
      %p40 = scmp.ne.s32.totalorder %s32, %s35
      %p41 = scmp.eq.s32.totalorder %s22, 0
      %p42 = por %p40, %p41
      %p43 = scmp.ne.s32.totalorder %s32, %s35
      %p44 = scmp.eq.s32.totalorder %s27, 1
      %p45 = por %p43, %p44
      %p46 = scmp.ne.s32.totalorder %s35, %s36
      %p47 = scmp.eq.s32.totalorder %s27, 0
      %p48 = por %p46, %p47
      %p49 = scmp.ne.s32.totalorder %s35, %s36
      %p50 = scmp.eq.s32.totalorder %s28, 1
      %p51 = por %p49, %p50
      %p53 = scmp.ne.s32.totalorder %s36, %s52
      %p54 = scmp.eq.s32.totalorder %s28, 0
      %p55 = por %p53, %p54
      %s56 = ssub.s32 %s22, %s29
      %p57 = scmp.eq.s32.totalorder %s56, 0
      %s59 = sadd.s32 %s58, 1
      %s60 = scalar_select %p57, %s58, %s59
      %p63 = pneg %p57
      %p64 = scmp.eq.s32.totalorder %s22, 1
      %p65 = por %p63, %p64
      %p66 = scmp.ne.s32.totalorder %s58, %s61
      %p67 = scmp.eq.s32.totalorder %s22, 0
      %p68 = por %p66, %p67
      %p69 = scmp.ne.s32.totalorder %s58, %s61
      %p70 = scmp.eq.s32.totalorder %s27, 1
      %p71 = por %p69, %p70
      %p72 = scmp.ne.s32.totalorder %s61, %s62
      %p73 = scmp.eq.s32.totalorder %s27, 0
      %p74 = por %p72, %p73
      %p75 = scmp.ne.s32.totalorder %s61, %s62
      %p76 = scmp.eq.s32.totalorder %s28, 1
      %p77 = por %p75, %p76
      %p79 = scmp.ne.s32.totalorder %s62, %s78
      %p80 = scmp.eq.s32.totalorder %s28, 0
      %p81 = por %p79, %p80
      %s83 = sadd.s32 %s82, 1
      %p86 = scmp.eq.s32.totalorder %s22, 1
      %p87 = scmp.ne.s32.totalorder %s82, %s84
      %p88 = scmp.eq.s32.totalorder %s22, 0
      %p89 = por %p87, %p88
      %p90 = scmp.ne.s32.totalorder %s82, %s84
      %p91 = scmp.eq.s32.totalorder %s27, 1
      %p92 = por %p90, %p91
      %p93 = scmp.ne.s32.totalorder %s84, %s85
      %p94 = scmp.eq.s32.totalorder %s27, 0
      %p95 = por %p93, %p94
      %p96 = scmp.ne.s32.totalorder %s84, %s85
      %p97 = scmp.eq.s32.totalorder %s28, 1
      %p98 = por %p96, %p97
      %p100 = scmp.ne.s32.totalorder %s85, %s99
      %p101 = scmp.eq.s32.totalorder %s28, 0
      %p102 = por %p100, %p101
      %s104 = sadd.s32 %s103, 1
      %p107 = scmp.eq.s32.totalorder %s22, 1
      %p108 = scmp.ne.s32.totalorder %s103, %s105
      %p109 = scmp.eq.s32.totalorder %s22, 0
      %p110 = por %p108, %p109
      %p111 = scmp.ne.s32.totalorder %s103, %s105
      %p112 = scmp.eq.s32.totalorder %s27, 1
      %p113 = por %p111, %p112
      %p114 = scmp.ne.s32.totalorder %s105, %s106
      %p115 = scmp.eq.s32.totalorder %s27, 0
      %p116 = por %p114, %p115
      %p117 = scmp.ne.s32.totalorder %s105, %s106
      %p118 = scmp.eq.s32.totalorder %s28, 1
      %p119 = por %p117, %p118
      %p121 = scmp.ne.s32.totalorder %s106, %s120
      %p122 = scmp.eq.s32.totalorder %s28, 0
      %p123 = por %p121, %p122
      %s125 = sadd.s32 %s124, 1
      %p128 = scmp.eq.s32.totalorder %s22, 1
      %p129 = scmp.ne.s32.totalorder %s124, %s126
      %p130 = scmp.eq.s32.totalorder %s22, 0
      %p131 = por %p129, %p130
      %p132 = scmp.ne.s32.totalorder %s124, %s126
      %p133 = scmp.eq.s32.totalorder %s27, 1
      %p134 = por %p132, %p133
      %p135 = scmp.ne.s32.totalorder %s126, %s127
      %p136 = scmp.eq.s32.totalorder %s27, 0
      %p137 = por %p135, %p136
      %p138 = scmp.ne.s32.totalorder %s126, %s127
      %p139 = scmp.eq.s32.totalorder %s28, 1
      %p140 = por %p138, %p139
      %p142 = scmp.ne.s32.totalorder %s127, %s141
      %p143 = scmp.eq.s32.totalorder %s28, 0
      %p144 = por %p142, %p143
      %s146 = sadd.s32 %s145, 1
      %p149 = scmp.eq.s32.totalorder %s22, 1
      %p150 = scmp.ne.s32.totalorder %s145, %s147
      %p151 = scmp.eq.s32.totalorder %s22, 0
      %p152 = por %p150, %p151
      %p153 = scmp.ne.s32.totalorder %s145, %s147
      %p154 = scmp.eq.s32.totalorder %s27, 1
      %p155 = por %p153, %p154
      %p156 = scmp.ne.s32.totalorder %s147, %s148
      %p157 = scmp.eq.s32.totalorder %s27, 0
      %p158 = por %p156, %p157
      %p159 = scmp.ne.s32.totalorder %s147, %s148
      %p160 = scmp.eq.s32.totalorder %s28, 1
      %p161 = por %p159, %p160
      %p163 = scmp.ne.s32.totalorder %s148, %s162
      %p164 = scmp.eq.s32.totalorder %s28, 0
      %p165 = por %p163, %p164
      %s166 = ssub.s32 %s22, %s29
      %p167 = scmp.eq.s32.totalorder %s166, 0
      %s169 = sadd.s32 %s168, 1
      %s170 = scalar_select %p167, %s168, %s169
      %p173 = pneg %p167
      %p174 = scmp.eq.s32.totalorder %s22, 1
      %p175 = por %p173, %p174
      %p176 = scmp.ne.s32.totalorder %s168, %s171
      %p177 = scmp.eq.s32.totalorder %s22, 0
      %p178 = por %p176, %p177
      %p179 = scmp.ne.s32.totalorder %s168, %s171
      %p180 = scmp.eq.s32.totalorder %s27, 1
      %p181 = por %p179, %p180
      %p182 = scmp.ne.s32.totalorder %s171, %s172
      %p183 = scmp.eq.s32.totalorder %s27, 0
      %p184 = por %p182, %p183
      %p185 = scmp.ne.s32.totalorder %s171, %s172
      %p186 = scmp.eq.s32.totalorder %s28, 1
      %p187 = por %p185, %p186
      %p189 = scmp.ne.s32.totalorder %s172, %s188
      %p190 = scmp.eq.s32.totalorder %s28, 0
      %p191 = por %p189, %p190
      %p192 = scmp.le.s32.totalorder 1, %s22
      %p193 = scmp.lt.s32.totalorder %s22, 3
      %p194 = pnand %p192, %p193
      %p195 = pneg %p194
      // Predicated region
      $region9: #{tpu_custom_call.1} parent=5 // pred_check
        _
      $region10: #{tpu_custom_call.1} parent=5 // pred_check_branch
        %197 = sbr.rel (%p194) target = $region12
      $region11: #{tpu_custom_call.1} parent=5 // pred_region
        %s198 = ssub.s32 %s22, 1
        // Predicated region
        $region13: #{tpu_custom_call.1} parent=11 // pred_check
          %p199 = pneg %p95
        $region14: #{tpu_custom_call.1} parent=11 // pred_check_branch
          %201 = sbr.rel (%p199) target = $region16
        $region15: #{tpu_custom_call.1} parent=11 // pred_region
          %s203 = ssub.s32 256, 256
          %204 = vsyncadd [#allocation6], %s203
          %s205 = sshll.u32 [#allocation7], 4
          %s206 = int_to_ptr.vmem [resolvable:$true] %s205
          %211 = dma.hbm_to_vmem [thread:$0]  %s2, 256, %s206, [#allocation6], 128, 128, 8
        $region16: #{tpu_custom_call.1} parent=11 // pred_fallthru
          _
        // Predicated region
        $region17: #{tpu_custom_call.1} parent=11 // pred_check
          %p212 = pneg %p116
        $region18: #{tpu_custom_call.1} parent=11 // pred_check_branch
          %214 = sbr.rel (%p212) target = $region20
        $region19: #{tpu_custom_call.1} parent=11 // pred_region
          _
        $region20: #{tpu_custom_call.1} parent=11 // pred_fallthru
          _
        // Predicated region
        $region21: #{tpu_custom_call.1} parent=11 // pred_check
          %p215 = pneg %p137
        $region22: #{tpu_custom_call.1} parent=11 // pred_check_branch
          %217 = sbr.rel (%p215) target = $region24
        $region23: #{tpu_custom_call.1} parent=11 // pred_region
          %s219 = ssub.s32 256, 256
          %220 = vsyncadd [#allocation9], %s219
          %s221 = sshll.u32 [#allocation8], 4
          %s222 = int_to_ptr.vmem [resolvable:$true] %s221
          %227 = dma.hbm_to_vmem [thread:$0]  %s4, 256, %s222, [#allocation9], 128, 128, 8
        $region24: #{tpu_custom_call.1} parent=11 // pred_fallthru
          _
        // Predicated region
        $region25: #{tpu_custom_call.1} parent=11 // pred_check
          %p228 = pneg %p158
        $region26: #{tpu_custom_call.1} parent=11 // pred_check_branch
          %230 = sbr.rel (%p228) target = $region28
        $region27: #{tpu_custom_call.1} parent=11 // pred_region
          _
        $region28: #{tpu_custom_call.1} parent=11 // pred_fallthru
          _
      $region12: #{tpu_custom_call.1} parent=5 // pred_fallthru
        _
      %p231 = scmp.lt.s32.totalorder %s22, 2
      // Predicated region
      $region29: #{tpu_custom_call.1} parent=5 // pred_check
        %p232 = pneg %p231
      $region30: #{tpu_custom_call.1} parent=5 // pred_check_branch
        %234 = sbr.rel (%p232) target = $region32
      $region31: #{tpu_custom_call.1} parent=5 // pred_region
        // Predicated region
        $region33: #{tpu_custom_call.1} parent=31 // pred_check
          %p235 = pneg %p42
        $region34: #{tpu_custom_call.1} parent=31 // pred_check_branch
          %237 = sbr.rel (%p235) target = $region36
        $region35: #{tpu_custom_call.1} parent=31 // pred_region
          %s238 = sand.u32 %s32, 1
          %s239 = scalar_lea.sflag [#allocation3], %s238
          %s240 = sand.u32 %s32, 1
          %s241 = smul.addr %s240, 16
          %s242 = scalar_lea.vmem [#allocation2], %s241
          %s244 = ssub.s32 256, 256
          %245 = vsyncadd %s239, %s244
          %s246 = smul.addr %s22, 2
          %s247 = smul.addr %s246, 128
          %s248 = scalar_lea.hbm %s0, %s247
          %s249 = sshll.u32 %s242, 4
          %s250 = int_to_ptr.vmem [resolvable:$true] %s249
          %255 = dma.hbm_to_vmem [thread:$0]  %s248, 256, %s250, %s239, 128, 128, 8
        $region36: #{tpu_custom_call.1} parent=31 // pred_fallthru
          _
        // Predicated region
        $region37: #{tpu_custom_call.1} parent=31 // pred_check
          %p256 = pneg %p68
        $region38: #{tpu_custom_call.1} parent=31 // pred_check_branch
          %258 = sbr.rel (%p256) target = $region40
        $region39: #{tpu_custom_call.1} parent=31 // pred_region
          %s259 = sand.u32 %s22, 1
          %s260 = scalar_lea.sflag [#allocation6], %s259
          %s261 = sand.u32 %s58, 1
          %s262 = scalar_lea.vmem [#allocation5], %s261
          %s264 = ssub.s32 16, 16
          %265 = vsyncadd %s260, %s264
          %s266 = smul.addr %s22, 16
          %s267 = scalar_lea.hbm %s1, %s266
          %s269 = sshll.u32 %s262, 4
          %s270 = int_to_ptr.vmem [resolvable:$true] %s269
          %272 = dma.hbm_to_vmem [thread:$0]  %s267, 16, %s270, %s260
        $region40: #{tpu_custom_call.1} parent=31 // pred_fallthru
          _
      $region32: #{tpu_custom_call.1} parent=5 // pred_fallthru
        _
      %p273 = scmp.le.s32.totalorder 1, %s22
      %p274 = scmp.lt.s32.totalorder %s22, 3
      %p275 = pnand %p273, %p274
      %p276 = pneg %p275
      // Predicated region
      $region41: #{tpu_custom_call.1} parent=5 // pred_check
        _
      $region42: #{tpu_custom_call.1} parent=5 // pred_check_branch
        %278 = sbr.rel (%p275) target = $region44
      $region43: #{tpu_custom_call.1} parent=5 // pred_region
        %s279 = ssub.s32 %s22, 1
        %s280 = sand.u32 %s35, 1
        %s281 = scalar_lea.sflag [#allocation3], %s280
        %s282 = sand.u32 %s35, 1
        %s283 = smul.addr %s282, 16
        %s284 = scalar_lea.vmem [#allocation2], %s283
        // Predicated region
        $region45: #{tpu_custom_call.1} parent=43 // pred_check
          %p285 = pneg %p48
        $region46: #{tpu_custom_call.1} parent=43 // pred_check_branch
          %287 = sbr.rel (%p285) target = $region48
        $region47: #{tpu_custom_call.1} parent=43 // pred_region
          %288 = dma.done %s281, 256
        $region48: #{tpu_custom_call.1} parent=43 // pred_fallthru
          _
        %s289 = sand.u32 %s27, 1
        %s290 = scalar_lea.sflag [#allocation6], %s289
        %s291 = sand.u32 %s61, 1
        %s292 = scalar_lea.vmem [#allocation5], %s291
        // Predicated region
        $region49: #{tpu_custom_call.1} parent=43 // pred_check
          %p293 = pneg %p74
        $region50: #{tpu_custom_call.1} parent=43 // pred_check_branch
          %295 = sbr.rel (%p293) target = $region52
        $region51: #{tpu_custom_call.1} parent=43 // pred_region
          %296 = dma.done %s290, 16
        $region52: #{tpu_custom_call.1} parent=43 // pred_fallthru
          _
        // Predicated region
        $region53: #{tpu_custom_call.1} parent=43 // pred_check
          %p297 = pneg %p95
        $region54: #{tpu_custom_call.1} parent=43 // pred_check_branch
          %299 = sbr.rel (%p297) target = $region56
        $region55: #{tpu_custom_call.1} parent=43 // pred_region
          %300 = dma.done [#allocation6], 256
        $region56: #{tpu_custom_call.1} parent=43 // pred_fallthru
          _
        // Predicated region
        $region57: #{tpu_custom_call.1} parent=43 // pred_check
          %p301 = pneg %p137
        $region58: #{tpu_custom_call.1} parent=43 // pred_check_branch
          %303 = sbr.rel (%p301) target = $region60
        $region59: #{tpu_custom_call.1} parent=43 // pred_region
          %304 = dma.done [#allocation9], 256
        $region60: #{tpu_custom_call.1} parent=43 // pred_fallthru
          _
        %s305 = sand.u32 %s35, 1
        %s306 = scalar_lea.sflag [#allocation3], %s305
        %s307 = sand.u32 %s35, 1
        %s308 = smul.addr %s307, 16
        %s309 = scalar_lea.vmem [#allocation2], %s308
        %p310 = pneg %p48
        %p311 = pneg %p45
        %s312 = sand.u32 %s27, 1
        %s313 = scalar_lea.sflag [#allocation6], %s312
        %s314 = sand.u32 %s61, 1
        %s315 = scalar_lea.vmem [#allocation5], %s314
        %p316 = pneg %p74
        %p317 = pneg %p71
        %p318 = pneg %p95
        %p319 = pneg %p92
        %p320 = pneg %p116
        %p321 = pneg %p113
        %p322 = pneg %p137
        %p323 = pneg %p134
        %p324 = pneg %p158
        %p325 = pneg %p155
        %p326 = pneg %p184
        %p327 = pneg %p181
        %s328 = sand.u32 %s171, 1
        %s329 = scalar_lea.sflag [#allocation4], %s328
        %s330 = sand.u32 %s171, 1
        %s331 = smul.addr %s330, 16
        %s332 = scalar_lea.vmem [#allocation10], %s331
        %v333 = vld [vmem:[%s292] sm:$0x1]
        %v334 = vld [vmem:[#allocation7] sm:$0xff]
        %v335 = vld [vmem:[#allocation7 + $0x8] sm:$0xff]
        %v336 = vld [vmem:[%s3] sm:$0x1]
        %vm337 = vcmask 130048
        %v339 = vsel %vm337, %v333, 0
        %341 = vmatprep.subr.mxu0 0.0
        %342 = vmatpush1.msra.mxu0 0.0
        %343 = vmatprep.subr.mxu0 0.0
        %344 = vmatpush1.msra.mxu0 0.0
        %345 = vmatprep.subr.mxu0 0.0
        %346 = vmatpush1.msra.mxu0 0.0
        %347 = vmatprep.subr.mxu0 0.0
        %348 = vmatpush1.msra.mxu0 0.0
        %349 = vmatprep.subr.mxu0 0.0
        %350 = vmatpush1.msra.mxu0 0.0
        %351 = vmatprep.subr.mxu0 0.0
        %352 = vmatpush1.msra.mxu0 0.0
        %353 = vmatprep.subr.mxu0 0.0
        %354 = vmatpush1.msra.mxu0 0.0
        %355 = vmatprep.subr.mxu0 0.0
        %356 = vmatpush1.msra.mxu0 0.0
        %357 = vmatprep.subr.mxu0 0.0
        %358 = vmatpush1.msra.mxu0 0.0
        %359 = vmatprep.subr.mxu0 0.0
        %360 = vmatpush1.msra.mxu0 0.0
        %361 = vmatprep.subr.mxu0 0.0
        %362 = vmatpush1.msra.mxu0 0.0
        %363 = vmatprep.subr.mxu0 0.0
        %364 = vmatpush1.msra.mxu0 0.0
        %365 = vmatprep.subr.mxu0 0.0
        %366 = vmatpush1.msra.mxu0 0.0
        %367 = vmatprep.subr.mxu0 0.0
        %368 = vmatpush1.msra.mxu0 0.0
        %369 = vmatprep.subr.mxu0 0.0
        %370 = vmatpush1.msra.mxu0 %v335
        %371 = vmatprep.subr.mxu0 0.0
        %372 = vmatpush1.msra.mxu0 %v334
        %373 = vmatprep.subr.mxu0 0.0
        %374 = vmatpush2.msra.mxu0 0.0
        %375 = vmatprep.subr.mxu0 0.0
        %376 = vmatpush2.msra.mxu0 0.0
        %377 = vmatprep.subr.mxu0 0.0
        %378 = vmatpush2.msra.mxu0 0.0
        %379 = vmatprep.subr.mxu0 0.0
        %380 = vmatpush2.msra.mxu0 0.0
        %381 = vmatprep.subr.mxu0 0.0
        %382 = vmatpush2.msra.mxu0 0.0
        %383 = vmatprep.subr.mxu0 0.0
        %384 = vmatpush2.msra.mxu0 0.0
        %385 = vmatprep.subr.mxu0 0.0
        %386 = vmatpush2.msra.mxu0 0.0
        %387 = vmatprep.subr.mxu0 0.0
        %388 = vmatpush2.msra.mxu0 0.0
        %389 = vmatprep.subr.mxu0 0.0
        %390 = vmatpush2.msra.mxu0 0.0
        %391 = vmatprep.subr.mxu0 0.0
        %392 = vmatpush2.msra.mxu0 0.0
        %393 = vmatprep.subr.mxu0 0.0
        %394 = vmatpush2.msra.mxu0 0.0
        %395 = vmatprep.subr.mxu0 0.0
        %396 = vmatpush2.msra.mxu0 0.0
        %397 = vmatprep.subr.mxu0 0.0
        %398 = vmatpush2.msra.mxu0 0.0
        %399 = vmatprep.subr.mxu0 0.0
        %400 = vmatpush2.msra.mxu0 0.0
        %401 = vmatprep.subr.mxu0 0.0
        %402 = vmatpush2.msra.mxu0 0.0
        %403 = vmatprep.subr.mxu0 0.0
        %404 = vmatpush2.msra.mxu0 0.0
        %405 = vmatprep.mubr.f32.mxu0 0.0
        %406 = vmatmul.mubr.f32.gmra.mxu0 %v339
        %v407 = vpop.f32.mrf.mxu0
        %v408 = vadd.f32 %v336, %v407
        %v409 = vpop.f32.mrf.mxu0
        %410 = vdwg.mxu0
        %v411 = vld [vmem:[#allocation8] sm:$0xff]
        %v412 = vld [vmem:[#allocation8 + $0x8] sm:$0xff]
        %v413 = vld [vmem:[%s5] sm:$0x1]
        %414 = vmatprep.subr.mxu0 0.0
        %415 = vmatpush1.msra.mxu0 0.0
        %416 = vmatprep.subr.mxu0 0.0
        %417 = vmatpush1.msra.mxu0 0.0
        %418 = vmatprep.subr.mxu0 0.0
        %419 = vmatpush1.msra.mxu0 0.0
        %420 = vmatprep.subr.mxu0 0.0
        %421 = vmatpush1.msra.mxu0 0.0
        %422 = vmatprep.subr.mxu0 0.0
        %423 = vmatpush1.msra.mxu0 0.0
        %424 = vmatprep.subr.mxu0 0.0
        %425 = vmatpush1.msra.mxu0 0.0
        %426 = vmatprep.subr.mxu0 0.0
        %427 = vmatpush1.msra.mxu0 0.0
        %428 = vmatprep.subr.mxu0 0.0
        %429 = vmatpush1.msra.mxu0 0.0
        %430 = vmatprep.subr.mxu0 0.0
        %431 = vmatpush1.msra.mxu0 0.0
        %432 = vmatprep.subr.mxu0 0.0
        %433 = vmatpush1.msra.mxu0 0.0
        %434 = vmatprep.subr.mxu0 0.0
        %435 = vmatpush1.msra.mxu0 0.0
        %436 = vmatprep.subr.mxu0 0.0
        %437 = vmatpush1.msra.mxu0 0.0
        %438 = vmatprep.subr.mxu0 0.0
        %439 = vmatpush1.msra.mxu0 0.0
        %440 = vmatprep.subr.mxu0 0.0
        %441 = vmatpush1.msra.mxu0 0.0
        %442 = vmatprep.subr.mxu0 0.0
        %443 = vmatpush1.msra.mxu0 %v412
        %444 = vmatprep.subr.mxu0 0.0
        %445 = vmatpush1.msra.mxu0 %v411
        %446 = vmatprep.subr.mxu0 0.0
        %447 = vmatpush2.msra.mxu0 0.0
        %448 = vmatprep.subr.mxu0 0.0
        %449 = vmatpush2.msra.mxu0 0.0
        %450 = vmatprep.subr.mxu0 0.0
        %451 = vmatpush2.msra.mxu0 0.0
        %452 = vmatprep.subr.mxu0 0.0
        %453 = vmatpush2.msra.mxu0 0.0
        %454 = vmatprep.subr.mxu0 0.0
        %455 = vmatpush2.msra.mxu0 0.0
        %456 = vmatprep.subr.mxu0 0.0
        %457 = vmatpush2.msra.mxu0 0.0
        %458 = vmatprep.subr.mxu0 0.0
        %459 = vmatpush2.msra.mxu0 0.0
        %460 = vmatprep.subr.mxu0 0.0
        %461 = vmatpush2.msra.mxu0 0.0
        %462 = vmatprep.subr.mxu0 0.0
        %463 = vmatpush2.msra.mxu0 0.0
        %464 = vmatprep.subr.mxu0 0.0
        %465 = vmatpush2.msra.mxu0 0.0
        %466 = vmatprep.subr.mxu0 0.0
        %467 = vmatpush2.msra.mxu0 0.0
        %468 = vmatprep.subr.mxu0 0.0
        %469 = vmatpush2.msra.mxu0 0.0
        %470 = vmatprep.subr.mxu0 0.0
        %471 = vmatpush2.msra.mxu0 0.0
        %472 = vmatprep.subr.mxu0 0.0
        %473 = vmatpush2.msra.mxu0 0.0
        %474 = vmatprep.subr.mxu0 0.0
        %475 = vmatpush2.msra.mxu0 0.0
        %476 = vmatprep.subr.mxu0 0.0
        %477 = vmatpush2.msra.mxu0 0.0
        %478 = vmatprep.mubr.f32.mxu0 0.0
        %479 = vmatmul.mubr.f32.gmra.mxu0 %v339
        %v480 = vpop.f32.mrf.mxu0
        %v481 = vadd.f32 %v413, %v480
        %v482 = vpop.f32.mrf.mxu0
        %483 = vdwg.mxu0
        %v484 = vld [vmem:[%s284] sm:$0xff]
        %v485 = vld [vmem:[%s284 + $0x8] sm:$0xff]
        %vm486 = vcmask 261120
        %v487 = vsel %vm486, %v484, 0.0
        %v488 = vsel %vm486, %v485, 0.0
        %v489 = vadd.f32 %v487, %v488
        %v490 = vrot.slane %v489, 4
        %v491 = vadd.f32 %v489, %v490
        %v492 = vrot.slane %v491, 2
        %v493 = vadd.f32 %v491, %v492
        %v494 = vrot.slane %v493, 1
        %v495 = vadd.f32 %v493, %v494
        %v496 = vrcp.pop 16.0
        %v497 = vmul.f32 %v495, %v496
        %v498 = vsub.f32 %v484, %v497
        %v499 = vsub.f32 %v485, %v497
        %v500 = vmul.f32 %v498, %v498
        %v501 = vmul.f32 %v499, %v499
        %v502 = vsel %vm486, %v500, 0.0
        %v503 = vsel %vm486, %v501, 0.0
        %v504 = vadd.f32 %v502, %v503
        %v505 = vrot.slane %v504, 4
        %v506 = vadd.f32 %v504, %v505
        %v507 = vrot.slane %v506, 2
        %v508 = vadd.f32 %v506, %v507
        %v509 = vrot.slane %v508, 1
        %v510 = vadd.f32 %v508, %v509
        %v511 = vmul.f32 %v510, %v496
        %v512 = vadd.f32 %v511, 1e-05
        %v513 = vrsqrt.pop %v512
        %v514 = vmul.f32 %v408, %v513
        %v515 = vmul.f32 %v514, %v497
        %v516 = vsub.f32 %v481, %v515
        %v517 = vlaneseq
        %v518 = vshrl.u32 %v517, 7
        %v519 = vsub.s32 0, %v518
        %v520 = vrot.slane %v514, %v519
        %v521 = vmul.f32 %v520, %v484
        %v522 = vmul.f32 %v520, %v485
        %v523 = vlaneseq
        %v524 = vshrl.u32 %v523, 7
        %v525 = vsub.s32 0, %v524
        %v526 = vrot.slane %v516, %v525
        %v527 = vadd.f32 %v521, %v526
        %v528 = vadd.f32 %v522, %v526
        %529 = vst.msk [vmem:[%s332] sm:$0xff] %vm486, %v527
        %530 = vst.msk [vmem:[%s332 + $0x8] sm:$0xff] %vm486, %v528
        %s531 = sand.u32 %s171, 1
        %s532 = scalar_lea.sflag [#allocation4], %s531
        %s533 = sand.u32 %s171, 1
        %s534 = smul.addr %s533, 16
        %s535 = scalar_lea.vmem [#allocation10], %s534
        // Predicated region
        $region61: #{tpu_custom_call.1} parent=43 // pred_check
          %p536 = pneg %p181
        $region62: #{tpu_custom_call.1} parent=43 // pred_check_branch
          %538 = sbr.rel (%p536) target = $region64
        $region63: #{tpu_custom_call.1} parent=43 // pred_region
          %s540 = ssub.s32 256, 256
          %541 = vsyncadd %s532, %s540
          %s542 = smul.addr %s27, 2
          %s543 = smul.addr %s542, 128
          %s544 = scalar_lea.hbm %s6, %s543
          %s545 = sshll.u32 %s535, 4
          %s546 = int_to_ptr.vmem [resolvable:$true] %s545
          %551 = dma.vmem_to_hbm [thread:$0]  %s546, 256, %s544, %s532, 128, 128, 8
        $region64: #{tpu_custom_call.1} parent=43 // pred_fallthru
          _
      $region44: #{tpu_custom_call.1} parent=5 // pred_fallthru
        _
      %p552 = scmp.le.s32.totalorder 2, %s22
      // Predicated region
      $region65: #{tpu_custom_call.1} parent=5 // pred_check
        %p553 = pneg %p552
      $region66: #{tpu_custom_call.1} parent=5 // pred_check_branch
        %555 = sbr.rel (%p553) target = $region68
      $region67: #{tpu_custom_call.1} parent=5 // pred_region
        %s556 = ssub.s32 %s22, 2
        // Predicated region
        $region69: #{tpu_custom_call.1} parent=67 // pred_check
          %p557 = pneg %p187
        $region70: #{tpu_custom_call.1} parent=67 // pred_check_branch
          %559 = sbr.rel (%p557) target = $region72
        $region71: #{tpu_custom_call.1} parent=67 // pred_region
          %s560 = sand.u32 %s172, 1
          %s561 = scalar_lea.sflag [#allocation4], %s560
          %s562 = sand.u32 %s172, 1
          %s563 = smul.addr %s562, 16
          %s564 = scalar_lea.vmem [#allocation10], %s563
          %565 = dma.done %s561, 256
        $region72: #{tpu_custom_call.1} parent=67 // pred_fallthru
          _
      $region68: #{tpu_custom_call.1} parent=5 // pred_fallthru
        _
    $region6: #{tpu_custom_call.1} parent=1 // loop_footer
      %s26 = sadd.s32 1, %s22
    $region7: #{tpu_custom_call.1} parent=1 // loop_footer_branch
      %21 = sbr.rel target = $region3
    $region8: #{tpu_custom_call.1} parent=1 // loop_exit
      _
    %566 = vsyncpa [#allocation3], 1
    %s567 = scalar_lea.sflag [#allocation3], 1
    %568 = vsyncpa %s567, 1
    %569 = vsyncpa [#allocation6], 1
    %s570 = scalar_lea.sflag [#allocation6], 1
    %571 = vsyncpa %s570, 1
    %572 = vsyncpa [#allocation9], 1
    %573 = vsyncpa [#allocation4], 1
    %s574 = scalar_lea.sflag [#allocation4], 1
    %575 = vsyncpa %s574, 1

</llo_original>
